<compile_context>
chip_gen: v6e
topology: v6e:2x2x1
jax: 0.10.0
libtpu: 0.0.40
codegen_flags: <defaults>
</compile_context>

<pallas_src>
import jax
import jax.numpy as jnp
from jax.experimental import pallas as pl
from jax.experimental.pallas import tpu as pltpu

_LANE = 128       # lane width  (last-dim tiling unit)
_SUBLANE = 8      # sublane width (second-to-last-dim tiling unit)
_VMEM_BUDGET_BYTES = 24 * 1024 * 1024  # headroom under the default VMEM scope


def _round_up(x, m):
    return ((x + m - 1) // m) * m


def _make_fused_mlp_kernel(num_layers):
    """Fused MLP kernel for a fixed number of layers.

    Ref layout (per grid step):
      x_ref : [TILE_B, F0p]
      then for each layer i: w_ref [Fip, F(i+1)p], b_ref [1, F(i+1)p]
      o_ref : [TILE_B, FLp]
    All feature dims are padded to multiples of 128.
    """

    def kernel(x_ref, *refs):
        o_ref = refs[-1]
        h = x_ref[...]
        for i in range(num_layers):
            w = refs[2 * i][...]
            b = refs[2 * i + 1][...]          # [1, dout] — broadcasts over rows
            h = jnp.tanh(
                jnp.dot(h, w, preferred_element_type=jnp.float32) + b
            )
        o_ref[...] = h.astype(o_ref.dtype)

    return kernel


def _pick_batch_tile(B, pdims):
    """Largest 8-aligned batch tile keeping params + double-buffered I/O tiles
    + live activations inside the VMEM budget."""
    b_aligned = _round_up(B, _SUBLANE)
    param_bytes = sum(
        pdims[i] * pdims[i + 1] + pdims[i + 1] for i in range(len(pdims) - 1)
    ) * 4
    max_feat = max(pdims)
    candidates = (2048, 1024, 512, 256, 128, 64, 32, 16, _SUBLANE)
    for tile in candidates:
        if tile > b_aligned:
            continue
        # 2x double-buffered input + output tiles, plus ~2 live activation tiles.
        act_bytes = tile * (2 * pdims[0] + 2 * pdims[-1] + 2 * max_feat) * 4
        if param_bytes + act_bytes <= _VMEM_BUDGET_BYTES:
            return tile
    return _SUBLANE


@jax.jit
def net_forward(x, params):
    """Fused forward pass: activation(Linear_i(x)) for every layer.

    x      : [B, dim_in] float32
    params : list of (w [din, dout], b [1, dout]) float32 (unpadded)
    """
    B, din = x.shape
    num_layers = len(params)
    dims = [din] + [w.shape[1] for w, _ in params]
    pdims = [_round_up(d, _LANE) for d in dims]          # lane-dense feature dims

    tile_b = _pick_batch_tile(B, pdims)
    b_pad = _round_up(B, tile_b)

    # Zero-pad input and parameters (zeros are numerically inert: padded
    # weight rows/cols and bias entries are 0, so padded activation columns
    # stay 0 through tanh).
    x_p = jnp.zeros((b_pad, pdims[0]), jnp.float32).at[:B, :din].set(
        x.astype(jnp.float32))

    flat_params = []
    for i, (w, b) in enumerate(params):
        w_p = jnp.zeros((pdims[i], pdims[i + 1]), jnp.float32)
        w_p = w_p.at[: dims[i], : dims[i + 1]].set(w.astype(jnp.float32))
        b_p = jnp.zeros((1, pdims[i + 1]), jnp.float32)
        b_p = b_p.at[:, : dims[i + 1]].set(b.astype(jnp.float32))
        flat_params.extend([w_p, b_p])

    grid = (b_pad // tile_b,)

    in_specs = [pl.BlockSpec((tile_b, pdims[0]), lambda i: (i, 0))]
    for li in range(num_layers):
        # Constant index_maps -> weights/biases stay VMEM-resident across
        # all batch-grid steps.
        in_specs.append(
            pl.BlockSpec((pdims[li], pdims[li + 1]), lambda i: (0, 0)))
        in_specs.append(
            pl.BlockSpec((1, pdims[li + 1]), lambda i: (0, 0)))

    out_spec = pl.BlockSpec((tile_b, pdims[-1]), lambda i: (i, 0))

    # Advisory cost hint for XLA's scheduler (padded sizes).
    flops = 2 * b_pad * sum(pdims[i] * pdims[i + 1] for i in range(num_layers))
    transcendentals = b_pad * sum(pdims[i + 1] for i in range(num_layers))
    bytes_accessed = 4 * (
        b_pad * pdims[0]
        + b_pad * pdims[-1]
        + sum(pdims[i] * pdims[i + 1] + pdims[i + 1] for i in range(num_layers))
    )
    cost = pl.CostEstimate(
        flops=flops,
        transcendentals=transcendentals,
        bytes_accessed=bytes_accessed,
    )

    out_p = pl.pallas_call(
        _make_fused_mlp_kernel(num_layers),
        out_shape=jax.ShapeDtypeStruct((b_pad, pdims[-1]), jnp.float32),
        grid=grid,
        in_specs=in_specs,
        out_specs=out_spec,
        compiler_params=pltpu.CompilerParams(
            dimension_semantics=("parallel",),   # 2x on v7x; no-op on v5e/v6e
        ),
        cost_estimate=cost,
    )(x_p, *flat_params)

    return out_p[:B, : dims[-1]]


def init_net_params(key, dim_in, dim_hidden_layers, dim_out):
    """Deterministic init matching torch.nn.Linear's U(-1/sqrt(fan_in), +)."""
    ann_dims = [dim_in] + list(dim_hidden_layers) + [dim_out]
    params = []
    for i in range(len(ann_dims) - 1):
        fan_in, fan_out = ann_dims[i], ann_dims[i + 1]
        key, kw, kb = jax.random.split(key, 3)
        bound = 1.0 / (fan_in ** 0.5)
        # stored as [in, out] (transposed relative to torch's [out, in])
        w = jax.random.uniform(kw, (fan_in, fan_out), jnp.float32, -bound, bound)
        b = jax.random.uniform(kb, (1, fan_out), jnp.float32, -bound, bound)
        params.append((w, b))
    return params


def net_forward_ref(x, params):
    """Pure-JAX reference for correctness checking."""
    result = x
    for w, b in params:
        result = jnp.tanh(result @ w + b)
    return result


if __name__ == "__main__":
    key = jax.random.PRNGKey(0)
    k_in, k_in2, k_params = jax.random.split(key, 3)

    # Small, module-consistent shapes: dim_in=4, hidden=[32, 32], dim_out=3
    dim_in = 4
    dim_hidden_layers = [32, 32]
    dim_out = 3
    params = init_net_params(k_params, dim_in, dim_hidden_layers, dim_out)

    # Case 1: small aligned batch.
    batch = 8
    x = jax.random.normal(k_in, (batch, dim_in), dtype=jnp.float32)
    out = jax.block_until_ready(net_forward(x, params))
    ref = net_forward_ref(x, params)
    assert out.shape == (batch, dim_out), out.shape
    assert jnp.allclose(out, ref, atol=1e-5, rtol=1e-5), "mismatch vs reference"

    # Case 2: non-multiple-of-8 batch exercises the padding path.
    batch2 = 13
    x2 = jax.random.normal(k_in2, (batch2, dim_in), dtype=jnp.float32)
    out2 = jax.block_until_ready(net_forward(x2, params))
    ref2 = net_forward_ref(x2, params)
    assert out2.shape == (batch2, dim_out), out2.shape
    assert jnp.allclose(out2, ref2, atol=1e-5, rtol=1e-5), \
        "mismatch vs reference (padded batch)"

    print("KERNEL_OK")
</pallas_src>

<mosaic_0001>
module attributes {stable_mosaic.version = 11 : i64} {
  func.func @kernel(%arg0: i32, %arg1: memref<8x128xf32, #tpu.memory_space<vmem>>, %arg2: memref<128x128xf32, #tpu.memory_space<vmem>>, %arg3: memref<1x128xf32, #tpu.memory_space<vmem>>, %arg4: memref<128x128xf32, #tpu.memory_space<vmem>>, %arg5: memref<1x128xf32, #tpu.memory_space<vmem>>, %arg6: memref<128x128xf32, #tpu.memory_space<vmem>>, %arg7: memref<1x128xf32, #tpu.memory_space<vmem>>, %arg8: memref<8x128xf32, #tpu.memory_space<vmem>>) attributes {dimension_semantics = [#tpu.dimension_semantics<parallel>], iteration_bounds = array<i64: 1>, scalar_prefetch = 0 : i64, scratch_operands = 0 : i64, tpu.core_type = #tpu.core_type<tc>, window_params = [{transform_indices = @transform_0, window_bounds = array<i64: 8, 128>}, {pipeline_mode = #tpu.pipeline_mode<synchronous>, transform_indices = @transform_1, window_bounds = array<i64: 128, 128>}, {pipeline_mode = #tpu.pipeline_mode<synchronous>, transform_indices = @transform_2, window_bounds = array<i64: 1, 128>}, {pipeline_mode = #tpu.pipeline_mode<synchronous>, transform_indices = @transform_3, window_bounds = array<i64: 128, 128>}, {pipeline_mode = #tpu.pipeline_mode<synchronous>, transform_indices = @transform_4, window_bounds = array<i64: 1, 128>}, {pipeline_mode = #tpu.pipeline_mode<synchronous>, transform_indices = @transform_5, window_bounds = array<i64: 128, 128>}, {pipeline_mode = #tpu.pipeline_mode<synchronous>, transform_indices = @transform_6, window_bounds = array<i64: 1, 128>}, {transform_indices = @transform_7, window_bounds = array<i64: 8, 128>}]} {
    %c0 = arith.constant 0 : index
    %c0_0 = arith.constant 0 : index
    %0 = vector.load %arg1[%c0, %c0_0] : memref<8x128xf32, #tpu.memory_space<vmem>>, vector<8x128xf32>
    %c0_1 = arith.constant 0 : index
    %c0_2 = arith.constant 0 : index
    %1 = vector.load %arg2[%c0_1, %c0_2] : memref<128x128xf32, #tpu.memory_space<vmem>>, vector<128x128xf32>
    %c0_3 = arith.constant 0 : index
    %c0_4 = arith.constant 0 : index
    %2 = vector.load %arg3[%c0_3, %c0_4] : memref<1x128xf32, #tpu.memory_space<vmem>>, vector<1x128xf32>
    %cst = arith.constant dense<0.000000e+00> : vector<8x128xf32>
    %3 = tpu.matmul %0, %1, %cst {dimension_numbers = #tpu.dot_dimension_numbers<[1], [0], [0], [1], [0, 0, 1, 1], [], []>} : vector<8x128xf32>, vector<128x128xf32>, vector<8x128xf32> -> vector<8x128xf32>
    %4 = vector.broadcast %2 : vector<1x128xf32> to vector<8x128xf32>
    %5 = arith.addf %3, %4 : vector<8x128xf32>
    %6 = math.tanh %5 : vector<8x128xf32>
    %c0_5 = arith.constant 0 : index
    %c0_6 = arith.constant 0 : index
    %7 = vector.load %arg4[%c0_5, %c0_6] : memref<128x128xf32, #tpu.memory_space<vmem>>, vector<128x128xf32>
    %c0_7 = arith.constant 0 : index
    %c0_8 = arith.constant 0 : index
    %8 = vector.load %arg5[%c0_7, %c0_8] : memref<1x128xf32, #tpu.memory_space<vmem>>, vector<1x128xf32>
    %cst_9 = arith.constant dense<0.000000e+00> : vector<8x128xf32>
    %9 = tpu.matmul %6, %7, %cst_9 {dimension_numbers = #tpu.dot_dimension_numbers<[1], [0], [0], [1], [0, 0, 1, 1], [], []>} : vector<8x128xf32>, vector<128x128xf32>, vector<8x128xf32> -> vector<8x128xf32>
    %10 = vector.broadcast %8 : vector<1x128xf32> to vector<8x128xf32>
    %11 = arith.addf %9, %10 : vector<8x128xf32>
    %12 = math.tanh %11 : vector<8x128xf32>
    %c0_10 = arith.constant 0 : index
    %c0_11 = arith.constant 0 : index
    %13 = vector.load %arg6[%c0_10, %c0_11] : memref<128x128xf32, #tpu.memory_space<vmem>>, vector<128x128xf32>
    %c0_12 = arith.constant 0 : index
    %c0_13 = arith.constant 0 : index
    %14 = vector.load %arg7[%c0_12, %c0_13] : memref<1x128xf32, #tpu.memory_space<vmem>>, vector<1x128xf32>
    %cst_14 = arith.constant dense<0.000000e+00> : vector<8x128xf32>
    %15 = tpu.matmul %12, %13, %cst_14 {dimension_numbers = #tpu.dot_dimension_numbers<[1], [0], [0], [1], [0, 0, 1, 1], [], []>} : vector<8x128xf32>, vector<128x128xf32>, vector<8x128xf32> -> vector<8x128xf32>
    %16 = vector.broadcast %14 : vector<1x128xf32> to vector<8x128xf32>
    %17 = arith.addf %15, %16 : vector<8x128xf32>
    %18 = math.tanh %17 : vector<8x128xf32>
    %c0_15 = arith.constant 0 : index
    %c0_16 = arith.constant 0 : index
    %19 = vector.load %arg8[%c0_15, %c0_16] : memref<8x128xf32, #tpu.memory_space<vmem>>, vector<8x128xf32>
    tpu.vector_store %arg8[%c0_15, %c0_16], %18 {strides = array<i32>} : memref<8x128xf32, #tpu.memory_space<vmem>>, vector<8x128xf32>,
    return
  }
  func.func @transform_0(%arg0: i32) -> (i32, i32) {
    %c0_i32 = arith.constant 0 : i32
    %c0_i32_0 = arith.constant 0 : i32
    return %arg0, %c0_i32 : i32, i32
  }
  func.func @transform_1(%arg0: i32) -> (i32, i32) {
    %c0_i32 = arith.constant 0 : i32
    %c0_i32_0 = arith.constant 0 : i32
    %c0_i32_1 = arith.constant 0 : i32
    return %c0_i32, %c0_i32_0 : i32, i32
  }
  func.func @transform_2(%arg0: i32) -> (i32, i32) {
    %c0_i32 = arith.constant 0 : i32
    %c0_i32_0 = arith.constant 0 : i32
    %c0_i32_1 = arith.constant 0 : i32
    return %c0_i32, %c0_i32_0 : i32, i32
  }
  func.func @transform_3(%arg0: i32) -> (i32, i32) {
    %c0_i32 = arith.constant 0 : i32
    %c0_i32_0 = arith.constant 0 : i32
    %c0_i32_1 = arith.constant 0 : i32
    return %c0_i32, %c0_i32_0 : i32, i32
  }
  func.func @transform_4(%arg0: i32) -> (i32, i32) {
    %c0_i32 = arith.constant 0 : i32
    %c0_i32_0 = arith.constant 0 : i32
    %c0_i32_1 = arith.constant 0 : i32
    return %c0_i32, %c0_i32_0 : i32, i32
  }
  func.func @transform_5(%arg0: i32) -> (i32, i32) {
    %c0_i32 = arith.constant 0 : i32
    %c0_i32_0 = arith.constant 0 : i32
    %c0_i32_1 = arith.constant 0 : i32
    return %c0_i32, %c0_i32_0 : i32, i32
  }
  func.func @transform_6(%arg0: i32) -> (i32, i32) {
    %c0_i32 = arith.constant 0 : i32
    %c0_i32_0 = arith.constant 0 : i32
    %c0_i32_1 = arith.constant 0 : i32
    return %c0_i32, %c0_i32_0 : i32, i32
  }
  func.func @transform_7(%arg0: i32) -> (i32, i32) {
    %c0_i32 = arith.constant 0 : i32
    %c0_i32_0 = arith.constant 0 : i32
    return %arg0, %c0_i32 : i32, i32
  }
}

</mosaic_0001>

<llo_original>
// kernel: net_forward.1
$region0: #{net_forward.1}
  #allocation0 [shape = 'u32[]', space=smem, size = 0x4, offset = 0x4, fixed_abs, tag = 'smem constant byte address 0x4 - core index']
  #allocation1 [shape = 'u32[144,128]{1,0:T(1,128)}', space=vmem, size = 0x12000, scoped, tag = 'internal scratch']
  %s0 = inlined_call_operand.vmem [shape: f32[8,128], index: 0, kind: input, shape index: {}]
  %s1 = inlined_call_operand.vmem [shape: f32[128,128], index: 1, kind: input, shape index: {}]
  %s2 = inlined_call_operand.vmem [shape: f32[1,128], index: 2, kind: input, shape index: {}]
  %s3 = inlined_call_operand.vmem [shape: f32[128,128], index: 3, kind: input, shape index: {}]
  %s4 = inlined_call_operand.vmem [shape: f32[1,128], index: 4, kind: input, shape index: {}]
  %s5 = inlined_call_operand.vmem [shape: f32[128,128], index: 5, kind: input, shape index: {}]
  %s6 = inlined_call_operand.vmem [shape: f32[1,128], index: 6, kind: input, shape index: {}]
  %s7 = inlined_call_operand.vmem [shape: f32[8,128], index: 7, kind: output, shape index: {}]
  %s8 = sld [smem:[#allocation0]]
  $region38: #{net_forward.1} parent=0
    _
  %s10 = ssub.s32 1, %s8
  %s11 = scalar_select 0, %s10, %s8
  // Predicated region
  $region2: #{net_forward.1} parent=0 // pred_check
    _
  $region3: #{net_forward.1} parent=0 // pred_check_branch
    %13 = sbr.rel (0) target = $region5
  $region4: #{net_forward.1} parent=0 // pred_region
    _
  $region5: #{net_forward.1} parent=0 // pred_fallthru
    _
  // Predicated region
  $region6: #{net_forward.1} parent=0 // pred_check
    _
  $region7: #{net_forward.1} parent=0 // pred_check_branch
    %15 = sbr.rel (0) target = $region9
  $region8: #{net_forward.1} parent=0 // pred_region
    _
  $region9: #{net_forward.1} parent=0 // pred_fallthru
    _
  // Predicated region
  $region10: #{net_forward.1} parent=0 // pred_check
    _
  $region11: #{net_forward.1} parent=0 // pred_check_branch
    %17 = sbr.rel (0) target = $region13
  $region12: #{net_forward.1} parent=0 // pred_region
    _
  $region13: #{net_forward.1} parent=0 // pred_fallthru
    _
  // Predicated region
  $region14: #{net_forward.1} parent=0 // pred_check
    _
  $region15: #{net_forward.1} parent=0 // pred_check_branch
    %19 = sbr.rel (0) target = $region17
  $region16: #{net_forward.1} parent=0 // pred_region
    _
  $region17: #{net_forward.1} parent=0 // pred_fallthru
    _
  // Predicated region
  $region18: #{net_forward.1} parent=0 // pred_check
    _
  $region19: #{net_forward.1} parent=0 // pred_check_branch
    %21 = sbr.rel (0) target = $region21
  $region20: #{net_forward.1} parent=0 // pred_region
    _
  $region21: #{net_forward.1} parent=0 // pred_fallthru
    _
  // Predicated region
  $region22: #{net_forward.1} parent=0 // pred_check
    _
  $region23: #{net_forward.1} parent=0 // pred_check_branch
    %23 = sbr.rel (0) target = $region25
  $region24: #{net_forward.1} parent=0 // pred_region
    _
  $region25: #{net_forward.1} parent=0 // pred_fallthru
    _
  // Predicated region
  $region26: #{net_forward.1} parent=0 // pred_check
    _
  $region27: #{net_forward.1} parent=0 // pred_check_branch
    %25 = sbr.rel (0) target = $region29
  $region28: #{net_forward.1} parent=0 // pred_region
    _
  $region29: #{net_forward.1} parent=0 // pred_fallthru
    _
  %v26 = vld [vmem:[%s0] sm:$0xff]
  %v27 = vld [vmem:[%s1] sm:$0xff]
  %v28 = vld [vmem:[%s1 + $0x8] sm:$0xff]
  %v29 = vld [vmem:[%s1 + $0x10] sm:$0xff]
  %v30 = vld [vmem:[%s1 + $0x18] sm:$0xff]
  %v31 = vld [vmem:[%s1 + $0x20] sm:$0xff]
  %v32 = vld [vmem:[%s1 + $0x28] sm:$0xff]
  %v33 = vld [vmem:[%s1 + $0x30] sm:$0xff]
  %v34 = vld [vmem:[%s1 + $0x38] sm:$0xff]
  %v35 = vld [vmem:[%s1 + $0x40] sm:$0xff]
  %v36 = vld [vmem:[%s1 + $0x48] sm:$0xff]
  %v37 = vld [vmem:[%s1 + $0x50] sm:$0xff]
  %v38 = vld [vmem:[%s1 + $0x58] sm:$0xff]
  %v39 = vld [vmem:[%s1 + $0x60] sm:$0xff]
  %v40 = vld [vmem:[%s1 + $0x68] sm:$0xff]
  %v41 = vld [vmem:[%s1 + $0x70] sm:$0xff]
  %v42 = vld [vmem:[%s1 + $0x78] sm:$0xff]
  %v43 = vld [vmem:[%s2] sm:$0x1]
  %v45 = vlaneseq
  %v46 = vshrl.u32 %v45, 7
  %v47 = vsub.s32 0, %v46
  %v48 = vrot.slane %v43, %v47
  %50 = vmatprep.subr.mxu0 0.0
  %51 = vmatpush1.msra.mxu0 %v42
  %52 = vmatprep.subr.mxu0 0.0
  %53 = vmatpush1.msra.mxu0 %v41
  %54 = vmatprep.subr.mxu0 0.0
  %55 = vmatpush1.msra.mxu0 %v40
  %56 = vmatprep.subr.mxu0 0.0
  %57 = vmatpush1.msra.mxu0 %v39
  %58 = vmatprep.subr.mxu0 0.0
  %59 = vmatpush1.msra.mxu0 %v38
  %60 = vmatprep.subr.mxu0 0.0
  %61 = vmatpush1.msra.mxu0 %v37
  %62 = vmatprep.subr.mxu0 0.0
  %63 = vmatpush1.msra.mxu0 %v36
  %64 = vmatprep.subr.mxu0 0.0
  %65 = vmatpush1.msra.mxu0 %v35
  %66 = vmatprep.subr.mxu0 0.0
  %67 = vmatpush1.msra.mxu0 %v34
  %68 = vmatprep.subr.mxu0 0.0
  %69 = vmatpush1.msra.mxu0 %v33
  %70 = vmatprep.subr.mxu0 0.0
  %71 = vmatpush1.msra.mxu0 %v32
  %72 = vmatprep.subr.mxu0 0.0
  %73 = vmatpush1.msra.mxu0 %v31
  %74 = vmatprep.subr.mxu0 0.0
  %75 = vmatpush1.msra.mxu0 %v30
  %76 = vmatprep.subr.mxu0 0.0
  %77 = vmatpush1.msra.mxu0 %v29
  %78 = vmatprep.subr.mxu0 0.0
  %79 = vmatpush1.msra.mxu0 %v28
  %80 = vmatprep.subr.mxu0 0.0
  %81 = vmatpush1.msra.mxu0 %v27
  %82 = vmatprep.subr.mxu0 0.0
  %83 = vmatpush2.msra.mxu0 0.0
  %84 = vmatprep.subr.mxu0 0.0
  %85 = vmatpush2.msra.mxu0 0.0
  %86 = vmatprep.subr.mxu0 0.0
  %87 = vmatpush2.msra.mxu0 0.0
  %88 = vmatprep.subr.mxu0 0.0
  %89 = vmatpush2.msra.mxu0 0.0
  %90 = vmatprep.subr.mxu0 0.0
  %91 = vmatpush2.msra.mxu0 0.0
  %92 = vmatprep.subr.mxu0 0.0
  %93 = vmatpush2.msra.mxu0 0.0
  %94 = vmatprep.subr.mxu0 0.0
  %95 = vmatpush2.msra.mxu0 0.0
  %96 = vmatprep.subr.mxu0 0.0
  %97 = vmatpush2.msra.mxu0 0.0
  %98 = vmatprep.subr.mxu0 0.0
  %99 = vmatpush2.msra.mxu0 0.0
  %100 = vmatprep.subr.mxu0 0.0
  %101 = vmatpush2.msra.mxu0 0.0
  %102 = vmatprep.subr.mxu0 0.0
  %103 = vmatpush2.msra.mxu0 0.0
  %104 = vmatprep.subr.mxu0 0.0
  %105 = vmatpush2.msra.mxu0 0.0
  %106 = vmatprep.subr.mxu0 0.0
  %107 = vmatpush2.msra.mxu0 0.0
  %108 = vmatprep.subr.mxu0 0.0
  %109 = vmatpush2.msra.mxu0 0.0
  %110 = vmatprep.subr.mxu0 0.0
  %111 = vmatpush2.msra.mxu0 0.0
  %112 = vmatprep.subr.mxu0 0.0
  %113 = vmatpush2.msra.mxu0 0.0
  %114 = vmatprep.mubr.f32.mxu0 0.0
  %115 = vmatmul.mubr.f32.gmra.mxu0 %v26
  %v116 = vpop.f32.mrf.mxu0
  %v117 = vadd.f32 %v48, %v116
  %v118 = vpop.f32.mrf.mxu0
  %119 = vdwg.mxu0
  %v120 = vtanh.pop %v117
  %v121 = vld [vmem:[%s3] sm:$0xff]
  %v122 = vld [vmem:[%s3 + $0x8] sm:$0xff]
  %v123 = vld [vmem:[%s3 + $0x10] sm:$0xff]
  %v124 = vld [vmem:[%s3 + $0x18] sm:$0xff]
  %v125 = vld [vmem:[%s3 + $0x20] sm:$0xff]
  %v126 = vld [vmem:[%s3 + $0x28] sm:$0xff]
  %v127 = vld [vmem:[%s3 + $0x30] sm:$0xff]
  %v128 = vld [vmem:[%s3 + $0x38] sm:$0xff]
  %v129 = vld [vmem:[%s3 + $0x40] sm:$0xff]
  %v130 = vld [vmem:[%s3 + $0x48] sm:$0xff]
  %v131 = vld [vmem:[%s3 + $0x50] sm:$0xff]
  %v132 = vld [vmem:[%s3 + $0x58] sm:$0xff]
  %v133 = vld [vmem:[%s3 + $0x60] sm:$0xff]
  %v134 = vld [vmem:[%s3 + $0x68] sm:$0xff]
  %v135 = vld [vmem:[%s3 + $0x70] sm:$0xff]
  %v136 = vld [vmem:[%s3 + $0x78] sm:$0xff]
  %v137 = vld [vmem:[%s4] sm:$0x1]
  %v139 = vlaneseq
  %v140 = vshrl.u32 %v139, 7
  %v141 = vsub.s32 0, %v140
  %v142 = vrot.slane %v137, %v141
  %144 = vmatprep.subr.mxu0 0.0
  %145 = vmatpush1.msra.mxu0 %v136
  %146 = vmatprep.subr.mxu0 0.0
  %147 = vmatpush1.msra.mxu0 %v135
  %148 = vmatprep.subr.mxu0 0.0
  %149 = vmatpush1.msra.mxu0 %v134
  %150 = vmatprep.subr.mxu0 0.0
  %151 = vmatpush1.msra.mxu0 %v133
  %152 = vmatprep.subr.mxu0 0.0
  %153 = vmatpush1.msra.mxu0 %v132
  %154 = vmatprep.subr.mxu0 0.0
  %155 = vmatpush1.msra.mxu0 %v131
  %156 = vmatprep.subr.mxu0 0.0
  %157 = vmatpush1.msra.mxu0 %v130
  %158 = vmatprep.subr.mxu0 0.0
  %159 = vmatpush1.msra.mxu0 %v129
  %160 = vmatprep.subr.mxu0 0.0
  %161 = vmatpush1.msra.mxu0 %v128
  %162 = vmatprep.subr.mxu0 0.0
  %163 = vmatpush1.msra.mxu0 %v127
  %164 = vmatprep.subr.mxu0 0.0
  %165 = vmatpush1.msra.mxu0 %v126
  %166 = vmatprep.subr.mxu0 0.0
  %167 = vmatpush1.msra.mxu0 %v125
  %168 = vmatprep.subr.mxu0 0.0
  %169 = vmatpush1.msra.mxu0 %v124
  %170 = vmatprep.subr.mxu0 0.0
  %171 = vmatpush1.msra.mxu0 %v123
  %172 = vmatprep.subr.mxu0 0.0
  %173 = vmatpush1.msra.mxu0 %v122
  %174 = vmatprep.subr.mxu0 0.0
  %175 = vmatpush1.msra.mxu0 %v121
  %176 = vmatprep.subr.mxu0 0.0
  %177 = vmatpush2.msra.mxu0 0.0
  %178 = vmatprep.subr.mxu0 0.0
  %179 = vmatpush2.msra.mxu0 0.0
  %180 = vmatprep.subr.mxu0 0.0
  %181 = vmatpush2.msra.mxu0 0.0
  %182 = vmatprep.subr.mxu0 0.0
  %183 = vmatpush2.msra.mxu0 0.0
  %184 = vmatprep.subr.mxu0 0.0
  %185 = vmatpush2.msra.mxu0 0.0
  %186 = vmatprep.subr.mxu0 0.0
  %187 = vmatpush2.msra.mxu0 0.0
  %188 = vmatprep.subr.mxu0 0.0
  %189 = vmatpush2.msra.mxu0 0.0
  %190 = vmatprep.subr.mxu0 0.0
  %191 = vmatpush2.msra.mxu0 0.0
  %192 = vmatprep.subr.mxu0 0.0
  %193 = vmatpush2.msra.mxu0 0.0
  %194 = vmatprep.subr.mxu0 0.0
  %195 = vmatpush2.msra.mxu0 0.0
  %196 = vmatprep.subr.mxu0 0.0
  %197 = vmatpush2.msra.mxu0 0.0
  %198 = vmatprep.subr.mxu0 0.0
  %199 = vmatpush2.msra.mxu0 0.0
  %200 = vmatprep.subr.mxu0 0.0
  %201 = vmatpush2.msra.mxu0 0.0
  %202 = vmatprep.subr.mxu0 0.0
  %203 = vmatpush2.msra.mxu0 0.0
  %204 = vmatprep.subr.mxu0 0.0
  %205 = vmatpush2.msra.mxu0 0.0
  %206 = vmatprep.subr.mxu0 0.0
  %207 = vmatpush2.msra.mxu0 0.0
  %208 = vmatprep.mubr.f32.mxu0 0.0
  %209 = vmatmul.mubr.f32.gmra.mxu0 %v120
  %v210 = vpop.f32.mrf.mxu0
  %v211 = vadd.f32 %v142, %v210
  %v212 = vpop.f32.mrf.mxu0
  %213 = vdwg.mxu0
  %v214 = vtanh.pop %v211
  %v215 = vld [vmem:[%s5] sm:$0xff]
  %v216 = vld [vmem:[%s5 + $0x8] sm:$0xff]
  %v217 = vld [vmem:[%s5 + $0x10] sm:$0xff]
  %v218 = vld [vmem:[%s5 + $0x18] sm:$0xff]
  %v219 = vld [vmem:[%s5 + $0x20] sm:$0xff]
  %v220 = vld [vmem:[%s5 + $0x28] sm:$0xff]
  %v221 = vld [vmem:[%s5 + $0x30] sm:$0xff]
  %v222 = vld [vmem:[%s5 + $0x38] sm:$0xff]
  %v223 = vld [vmem:[%s5 + $0x40] sm:$0xff]
  %v224 = vld [vmem:[%s5 + $0x48] sm:$0xff]
  %v225 = vld [vmem:[%s5 + $0x50] sm:$0xff]
  %v226 = vld [vmem:[%s5 + $0x58] sm:$0xff]
  %v227 = vld [vmem:[%s5 + $0x60] sm:$0xff]
  %v228 = vld [vmem:[%s5 + $0x68] sm:$0xff]
  %v229 = vld [vmem:[%s5 + $0x70] sm:$0xff]
  %v230 = vld [vmem:[%s5 + $0x78] sm:$0xff]
  %v231 = vld [vmem:[%s6] sm:$0x1]
  %v233 = vlaneseq
  %v234 = vshrl.u32 %v233, 7
  %v235 = vsub.s32 0, %v234
  %v236 = vrot.slane %v231, %v235
  %238 = vmatprep.subr.mxu0 0.0
  %239 = vmatpush1.msra.mxu0 %v230
  %240 = vmatprep.subr.mxu0 0.0
  %241 = vmatpush1.msra.mxu0 %v229
  %242 = vmatprep.subr.mxu0 0.0
  %243 = vmatpush1.msra.mxu0 %v228
  %244 = vmatprep.subr.mxu0 0.0
  %245 = vmatpush1.msra.mxu0 %v227
  %246 = vmatprep.subr.mxu0 0.0
  %247 = vmatpush1.msra.mxu0 %v226
  %248 = vmatprep.subr.mxu0 0.0
  %249 = vmatpush1.msra.mxu0 %v225
  %250 = vmatprep.subr.mxu0 0.0
  %251 = vmatpush1.msra.mxu0 %v224
  %252 = vmatprep.subr.mxu0 0.0
  %253 = vmatpush1.msra.mxu0 %v223
  %254 = vmatprep.subr.mxu0 0.0
  %255 = vmatpush1.msra.mxu0 %v222
  %256 = vmatprep.subr.mxu0 0.0
  %257 = vmatpush1.msra.mxu0 %v221
  %258 = vmatprep.subr.mxu0 0.0
  %259 = vmatpush1.msra.mxu0 %v220
  %260 = vmatprep.subr.mxu0 0.0
  %261 = vmatpush1.msra.mxu0 %v219
  %262 = vmatprep.subr.mxu0 0.0
  %263 = vmatpush1.msra.mxu0 %v218
  %264 = vmatprep.subr.mxu0 0.0
  %265 = vmatpush1.msra.mxu0 %v217
  %266 = vmatprep.subr.mxu0 0.0
  %267 = vmatpush1.msra.mxu0 %v216
  %268 = vmatprep.subr.mxu0 0.0
  %269 = vmatpush1.msra.mxu0 %v215
  %270 = vmatprep.subr.mxu0 0.0
  %271 = vmatpush2.msra.mxu0 0.0
  %272 = vmatprep.subr.mxu0 0.0
  %273 = vmatpush2.msra.mxu0 0.0
  %274 = vmatprep.subr.mxu0 0.0
  %275 = vmatpush2.msra.mxu0 0.0
  %276 = vmatprep.subr.mxu0 0.0
  %277 = vmatpush2.msra.mxu0 0.0
  %278 = vmatprep.subr.mxu0 0.0
  %279 = vmatpush2.msra.mxu0 0.0
  %280 = vmatprep.subr.mxu0 0.0
  %281 = vmatpush2.msra.mxu0 0.0
  %282 = vmatprep.subr.mxu0 0.0
  %283 = vmatpush2.msra.mxu0 0.0
  %284 = vmatprep.subr.mxu0 0.0
  %285 = vmatpush2.msra.mxu0 0.0
  %286 = vmatprep.subr.mxu0 0.0
  %287 = vmatpush2.msra.mxu0 0.0
  %288 = vmatprep.subr.mxu0 0.0
  %289 = vmatpush2.msra.mxu0 0.0
  %290 = vmatprep.subr.mxu0 0.0
  %291 = vmatpush2.msra.mxu0 0.0
  %292 = vmatprep.subr.mxu0 0.0
  %293 = vmatpush2.msra.mxu0 0.0
  %294 = vmatprep.subr.mxu0 0.0
  %295 = vmatpush2.msra.mxu0 0.0
  %296 = vmatprep.subr.mxu0 0.0
  %297 = vmatpush2.msra.mxu0 0.0
  %298 = vmatprep.subr.mxu0 0.0
  %299 = vmatpush2.msra.mxu0 0.0
  %300 = vmatprep.subr.mxu0 0.0
  %301 = vmatpush2.msra.mxu0 0.0
  %302 = vmatprep.mubr.f32.mxu0 0.0
  %303 = vmatmul.mubr.f32.gmra.mxu0 %v214
  %v304 = vpop.f32.mrf.mxu0
  %v305 = vadd.f32 %v236, %v304
  %v306 = vpop.f32.mrf.mxu0
  %307 = vdwg.mxu0
  %v308 = vtanh.pop %v305
  %309 = vst [vmem:[%s7] sm:$0xff] %v308
  // Predicated region
  $region30: #{net_forward.1} parent=0 // pred_check
    _
  $region31: #{net_forward.1} parent=0 // pred_check_branch
    %311 = sbr.rel (0) target = $region33
  $region32: #{net_forward.1} parent=0 // pred_region
    _
  $region33: #{net_forward.1} parent=0 // pred_fallthru
    _
  // Predicated region
  $region34: #{net_forward.1} parent=0 // pred_check
    _
  $region35: #{net_forward.1} parent=0 // pred_check_branch
    %313 = sbr.rel (0) target = $region37
  $region36: #{net_forward.1} parent=0 // pred_region
    _
  $region37: #{net_forward.1} parent=0 // pred_fallthru
    _

</llo_original>
